<compile_context>
chip_gen: v7x
topology: tpu7x:2x2x1
jax: 0.10.0
libtpu: 0.0.40
codegen_flags: <defaults>
</compile_context>

<pallas_src>
import jax
import jax.numpy as jnp
from jax import lax
from jax.experimental import pallas as pl
from jax.experimental.pallas import tpu as pltpu

# ----------------------------- config (cfg) ----------------------------------
BATCH = 2
SEQ_LEN = 8          # cfg.seq_len
FEATURE_NUM = 32     # cfg.feature_num
HIDDEN = 128         # cfg.hidden  (multiple of 128 -> lane-dense)
EMB_NORM = True      # cfg.emb_norm
LN_EPS = 1e-12       # LayerNorm variance_epsilon (TF style)


def _layer_norm(v, gamma, beta):
    """TF-style LayerNorm over the last dim: gamma*(x-u)/sqrt(var+eps)+beta."""
    u = jnp.mean(v, axis=-1, keepdims=True)
    d = v - u
    s = jnp.mean(d * d, axis=-1, keepdims=True)
    return gamma * (d * lax.rsqrt(s + LN_EPS)) + beta


# --------------------------- fused Pallas kernel ------------------------------
def embeddings_kernel(x_ref, w_ref, b_ref, pos_ref, gamma_ref, beta_ref, o_ref):
    """One batch element: Linear -> [LayerNorm] -> +pos_embed -> LayerNorm.

    x_ref:     (1, S, F)   input features
    w_ref:     (F, H)      Linear weight, pre-transposed to (in, out)
    b_ref:     (1, H)      Linear bias
    pos_ref:   (S, H)      rows 0..S-1 of the positional-embedding table
    gamma_ref: (1, H)      LayerNorm gamma
    beta_ref:  (1, H)      LayerNorm beta
    o_ref:     (1, S, H)
    """
    x = x_ref[0]                                            # (S, F)
    e = jnp.dot(x, w_ref[...], preferred_element_type=jnp.float32)
    e = e + b_ref[...]                                      # bias, broadcast over rows
    gamma = gamma_ref[...]
    beta = beta_ref[...]
    if EMB_NORM:                                            # static (trace-time) flag
        e = _layer_norm(e, gamma, beta)
    e = e + pos_ref[...]
    e = _layer_norm(e, gamma, beta)
    o_ref[0] = e.astype(o_ref.dtype)


# ------------------------------- wrapper --------------------------------------
def embeddings_forward(x, params):
    """x: (B, S, F) float32 -> (B, S, H) float32.  Single fused pallas_call."""
    B, S, F = x.shape
    w = params["w"]
    b = params["b"]
    pos_table = params["pos_embed"]
    gamma = params["gamma"]
    beta = params["beta"]
    H = w.shape[1]
    pos = pos_table[:S]                                     # static slice (pos = arange(S))
    return pl.pallas_call(
        embeddings_kernel,
        out_shape=jax.ShapeDtypeStruct((B, S, H), jnp.float32),
        grid=(B,),
        in_specs=[
            pl.BlockSpec((1, S, F), lambda bi: (bi, 0, 0)),
            pl.BlockSpec((F, H), lambda bi: (0, 0)),
            pl.BlockSpec((1, H), lambda bi: (0, 0)),
            pl.BlockSpec((S, H), lambda bi: (0, 0)),
            pl.BlockSpec((1, H), lambda bi: (0, 0)),
            pl.BlockSpec((1, H), lambda bi: (0, 0)),
        ],
        out_specs=pl.BlockSpec((1, S, H), lambda bi: (bi, 0, 0)),
        compiler_params=pltpu.CompilerParams(
            dimension_semantics=("parallel",)),
    )(x, w, b.reshape(1, H), pos, gamma.reshape(1, H), beta.reshape(1, H))


# -------------------------- deterministic params -------------------------------
def init_params(key):
    k1, k2, k3, k4, k5 = jax.random.split(key, 5)
    bound = 1.0 / (FEATURE_NUM ** 0.5)
    # nn.Linear stores weight as (H, F) and computes x @ W^T; we store the
    # mathematically equivalent (F, H) so no transpose is needed in-kernel.
    w = jax.random.uniform(k1, (FEATURE_NUM, HIDDEN), jnp.float32, -bound, bound)
    b = jax.random.uniform(k2, (HIDDEN,), jnp.float32, -bound, bound)
    pos_embed = jax.random.normal(k3, (SEQ_LEN, HIDDEN), jnp.float32)   # nn.Embedding weight
    # random (not ones/zeros) gamma/beta so the check actually exercises them
    gamma = jax.random.uniform(k4, (HIDDEN,), jnp.float32, 0.5, 1.5)
    beta = jax.random.normal(k5, (HIDDEN,), jnp.float32) * 0.1
    return {"w": w, "b": b, "pos_embed": pos_embed, "gamma": gamma, "beta": beta}


# ------------------------------ pure-JAX reference ------------------------------
def reference_forward(x, params):
    S = x.shape[1]
    e = x @ params["w"] + params["b"]
    if EMB_NORM:
        e = _layer_norm(e, params["gamma"], params["beta"])
    e = e + params["pos_embed"][:S][None]
    return _layer_norm(e, params["gamma"], params["beta"])


if __name__ == "__main__":
    key = jax.random.PRNGKey(0)
    pkey, xkey = jax.random.split(key)
    params = init_params(pkey)
    x = jax.random.normal(xkey, (BATCH, SEQ_LEN, FEATURE_NUM), jnp.float32)

    out = embeddings_forward(x, params)
    out = jax.block_until_ready(out)
    assert out.shape == (BATCH, SEQ_LEN, HIDDEN), out.shape

    ref = reference_forward(x, params)
    assert jnp.allclose(out, ref, atol=1e-4, rtol=1e-4), \
        float(jnp.max(jnp.abs(out - ref)))

    print("KERNEL_OK")
</pallas_src>

<mosaic_0001>
module attributes {stable_mosaic.version = 11 : i64} {
  func.func @embeddings_kernel(%arg0: i32, %arg1: memref<1x8x32xf32, #tpu.memory_space<vmem>>, %arg2: memref<32x128xf32, #tpu.memory_space<vmem>>, %arg3: memref<1x128xf32, #tpu.memory_space<vmem>>, %arg4: memref<8x128xf32, #tpu.memory_space<vmem>>, %arg5: memref<1x128xf32, #tpu.memory_space<vmem>>, %arg6: memref<1x128xf32, #tpu.memory_space<vmem>>, %arg7: memref<1x8x128xf32, #tpu.memory_space<vmem>>) attributes {dimension_semantics = [#tpu.dimension_semantics<parallel>], iteration_bounds = array<i64: 2>, scalar_prefetch = 0 : i64, scratch_operands = 0 : i64, tpu.core_type = #tpu.core_type<tc>, window_params = [{transform_indices = @transform_0, window_bounds = array<i64: 1, 8, 32>}, {pipeline_mode = #tpu.pipeline_mode<synchronous>, transform_indices = @transform_1, window_bounds = array<i64: 32, 128>}, {pipeline_mode = #tpu.pipeline_mode<synchronous>, transform_indices = @transform_2, window_bounds = array<i64: 1, 128>}, {pipeline_mode = #tpu.pipeline_mode<synchronous>, transform_indices = @transform_3, window_bounds = array<i64: 8, 128>}, {pipeline_mode = #tpu.pipeline_mode<synchronous>, transform_indices = @transform_4, window_bounds = array<i64: 1, 128>}, {pipeline_mode = #tpu.pipeline_mode<synchronous>, transform_indices = @transform_5, window_bounds = array<i64: 1, 128>}, {transform_indices = @transform_6, window_bounds = array<i64: 1, 8, 128>}]} {
    %c0 = arith.constant 0 : index
    %c0_0 = arith.constant 0 : index
    %c0_1 = arith.constant 0 : index
    %0 = vector.load %arg1[%c0, %c0_0, %c0_1] : memref<1x8x32xf32, #tpu.memory_space<vmem>>, vector<1x8x32xf32>
    %1 = vector.shape_cast %0 : vector<1x8x32xf32> to vector<8x32xf32>
    %c0_2 = arith.constant 0 : index
    %c0_3 = arith.constant 0 : index
    %2 = vector.load %arg2[%c0_2, %c0_3] : memref<32x128xf32, #tpu.memory_space<vmem>>, vector<32x128xf32>
    %cst = arith.constant dense<0.000000e+00> : vector<8x128xf32>
    %3 = tpu.matmul %1, %2, %cst {dimension_numbers = #tpu.dot_dimension_numbers<[1], [0], [0], [1], [0, 0, 1, 1], [], []>} : vector<8x32xf32>, vector<32x128xf32>, vector<8x128xf32> -> vector<8x128xf32>
    %c0_4 = arith.constant 0 : index
    %c0_5 = arith.constant 0 : index
    %4 = vector.load %arg3[%c0_4, %c0_5] : memref<1x128xf32, #tpu.memory_space<vmem>>, vector<1x128xf32>
    %5 = vector.broadcast %4 : vector<1x128xf32> to vector<8x128xf32>
    %6 = arith.addf %3, %5 : vector<8x128xf32>
    %c0_6 = arith.constant 0 : index
    %c0_7 = arith.constant 0 : index
    %7 = vector.load %arg5[%c0_6, %c0_7] : memref<1x128xf32, #tpu.memory_space<vmem>>, vector<1x128xf32>
    %c0_8 = arith.constant 0 : index
    %c0_9 = arith.constant 0 : index
    %8 = vector.load %arg6[%c0_8, %c0_9] : memref<1x128xf32, #tpu.memory_space<vmem>>, vector<1x128xf32>
    %cst_10 = arith.constant dense<0.000000e+00> : vector<8xf32>
    %9 = vector.multi_reduction <add>, %6, %cst_10 [1] : vector<8x128xf32> to vector<8xf32>
    %10 = vector.shape_cast %9 : vector<8xf32> to vector<8x1xf32>
    %cst_11 = arith.constant 1.280000e+02 : f32
    %11 = vector.broadcast %cst_11 : f32 to vector<8x1xf32>
    %12 = arith.divf %10, %11 : vector<8x1xf32>
    %13 = vector.broadcast %12 : vector<8x1xf32> to vector<8x128xf32>
    %14 = arith.subf %6, %13 : vector<8x128xf32>
    %15 = arith.mulf %14, %14 : vector<8x128xf32>
    %cst_12 = arith.constant dense<0.000000e+00> : vector<8xf32>
    %16 = vector.multi_reduction <add>, %15, %cst_12 [1] : vector<8x128xf32> to vector<8xf32>
    %17 = vector.shape_cast %16 : vector<8xf32> to vector<8x1xf32>
    %cst_13 = arith.constant 1.280000e+02 : f32
    %18 = vector.broadcast %cst_13 : f32 to vector<8x1xf32>
    %19 = arith.divf %17, %18 : vector<8x1xf32>
    %cst_14 = arith.constant 9.99999996E-13 : f32
    %20 = vector.broadcast %cst_14 : f32 to vector<8x1xf32>
    %21 = arith.addf %19, %20 : vector<8x1xf32>
    %22 = math.rsqrt %21 : vector<8x1xf32>
    %23 = vector.broadcast %22 : vector<8x1xf32> to vector<8x128xf32>
    %24 = arith.mulf %14, %23 : vector<8x128xf32>
    %25 = vector.broadcast %7 : vector<1x128xf32> to vector<8x128xf32>
    %26 = arith.mulf %25, %24 : vector<8x128xf32>
    %27 = vector.broadcast %8 : vector<1x128xf32> to vector<8x128xf32>
    %28 = arith.addf %26, %27 : vector<8x128xf32>
    %c0_15 = arith.constant 0 : index
    %c0_16 = arith.constant 0 : index
    %29 = vector.load %arg4[%c0_15, %c0_16] : memref<8x128xf32, #tpu.memory_space<vmem>>, vector<8x128xf32>
    %30 = arith.addf %28, %29 : vector<8x128xf32>
    %cst_17 = arith.constant dense<0.000000e+00> : vector<8xf32>
    %31 = vector.multi_reduction <add>, %30, %cst_17 [1] : vector<8x128xf32> to vector<8xf32>
    %32 = vector.shape_cast %31 : vector<8xf32> to vector<8x1xf32>
    %cst_18 = arith.constant 1.280000e+02 : f32
    %33 = vector.broadcast %cst_18 : f32 to vector<8x1xf32>
    %34 = arith.divf %32, %33 : vector<8x1xf32>
    %35 = vector.broadcast %34 : vector<8x1xf32> to vector<8x128xf32>
    %36 = arith.subf %30, %35 : vector<8x128xf32>
    %37 = arith.mulf %36, %36 : vector<8x128xf32>
    %cst_19 = arith.constant dense<0.000000e+00> : vector<8xf32>
    %38 = vector.multi_reduction <add>, %37, %cst_19 [1] : vector<8x128xf32> to vector<8xf32>
    %39 = vector.shape_cast %38 : vector<8xf32> to vector<8x1xf32>
    %cst_20 = arith.constant 1.280000e+02 : f32
    %40 = vector.broadcast %cst_20 : f32 to vector<8x1xf32>
    %41 = arith.divf %39, %40 : vector<8x1xf32>
    %cst_21 = arith.constant 9.99999996E-13 : f32
    %42 = vector.broadcast %cst_21 : f32 to vector<8x1xf32>
    %43 = arith.addf %41, %42 : vector<8x1xf32>
    %44 = math.rsqrt %43 : vector<8x1xf32>
    %45 = vector.broadcast %44 : vector<8x1xf32> to vector<8x128xf32>
    %46 = arith.mulf %36, %45 : vector<8x128xf32>
    %47 = vector.broadcast %7 : vector<1x128xf32> to vector<8x128xf32>
    %48 = arith.mulf %47, %46 : vector<8x128xf32>
    %49 = vector.broadcast %8 : vector<1x128xf32> to vector<8x128xf32>
    %50 = arith.addf %48, %49 : vector<8x128xf32>
    %c0_22 = arith.constant 0 : index
    %c0_23 = arith.constant 0 : index
    %c0_24 = arith.constant 0 : index
    %51 = vector.load %arg7[%c0_22, %c0_23, %c0_24] : memref<1x8x128xf32, #tpu.memory_space<vmem>>, vector<1x8x128xf32>
    %52 = vector.shape_cast %51 : vector<1x8x128xf32> to vector<8x128xf32>
    %53 = vector.shape_cast %50 : vector<8x128xf32> to vector<1x8x128xf32>
    tpu.vector_store %arg7[%c0_22, %c0_23, %c0_24], %53 {strides = array<i32>} : memref<1x8x128xf32, #tpu.memory_space<vmem>>, vector<1x8x128xf32>,
    return
  }
  func.func @transform_0(%arg0: i32) -> (i32, i32, i32) {
    %c0_i32 = arith.constant 0 : i32
    %c0_i32_0 = arith.constant 0 : i32
    %c0_i32_1 = arith.constant 0 : i32
    return %arg0, %c0_i32, %c0_i32_0 : i32, i32, i32
  }
  func.func @transform_1(%arg0: i32) -> (i32, i32) {
    %c0_i32 = arith.constant 0 : i32
    %c0_i32_0 = arith.constant 0 : i32
    %c0_i32_1 = arith.constant 0 : i32
    return %c0_i32, %c0_i32_0 : i32, i32
  }
  func.func @transform_2(%arg0: i32) -> (i32, i32) {
    %c0_i32 = arith.constant 0 : i32
    %c0_i32_0 = arith.constant 0 : i32
    %c0_i32_1 = arith.constant 0 : i32
    return %c0_i32, %c0_i32_0 : i32, i32
  }
  func.func @transform_3(%arg0: i32) -> (i32, i32) {
    %c0_i32 = arith.constant 0 : i32
    %c0_i32_0 = arith.constant 0 : i32
    %c0_i32_1 = arith.constant 0 : i32
    return %c0_i32, %c0_i32_0 : i32, i32
  }
  func.func @transform_4(%arg0: i32) -> (i32, i32) {
    %c0_i32 = arith.constant 0 : i32
    %c0_i32_0 = arith.constant 0 : i32
    %c0_i32_1 = arith.constant 0 : i32
    return %c0_i32, %c0_i32_0 : i32, i32
  }
  func.func @transform_5(%arg0: i32) -> (i32, i32) {
    %c0_i32 = arith.constant 0 : i32
    %c0_i32_0 = arith.constant 0 : i32
    %c0_i32_1 = arith.constant 0 : i32
    return %c0_i32, %c0_i32_0 : i32, i32
  }
  func.func @transform_6(%arg0: i32) -> (i32, i32, i32) {
    %c0_i32 = arith.constant 0 : i32
    %c0_i32_0 = arith.constant 0 : i32
    %c0_i32_1 = arith.constant 0 : i32
    return %arg0, %c0_i32, %c0_i32_0 : i32, i32, i32
  }
}

</mosaic_0001>

<llo_original>
// kernel: tpu_custom_call.1
$region0: #{tpu_custom_call.1}
  #allocation0 [shape = 'u32[]', space=smem, size = 0x4, offset = 0x4, fixed_abs, tag = 'smem constant byte address 0x4 - core index']
  #allocation1 [shape = 'u32[144,128]{1,0:T(1,128)}', space=vmem, size = 0x12000, scoped, tag = 'internal scratch']
  %s0 = inlined_call_operand.hbm [shape: f32[2,8,32], index: 0, kind: input, shape index: {}]
  %s1 = inlined_call_operand.hbm [shape: f32[32,128], index: 1, kind: input, shape index: {}]
  %s2 = inlined_call_operand.vmem [shape: f32[1,128], index: 2, kind: input, shape index: {}]
  %s3 = inlined_call_operand.vmem [shape: f32[8,128], index: 3, kind: input, shape index: {}]
  %s4 = inlined_call_operand.vmem [shape: f32[1,128], index: 4, kind: input, shape index: {}]
  %s5 = inlined_call_operand.vmem [shape: f32[1,128], index: 5, kind: input, shape index: {}]
  %s6 = inlined_call_operand.hbm [shape: f32[2,8,128], index: 6, kind: output, shape index: {}]
  %s7 = sld [smem:[#allocation0]]
  $region65: #{tpu_custom_call.1} parent=0
    _
  %s9 = ssub.s32 1, %s7
  %s10 = scalar_select 0, %s9, %s7
  $region1: #{tpu_custom_call.1} parent=0
    #allocation2 [shape = 'u8[8192]{0}', space=vmem, size = 0x2000, scoped, tag = 'input window, operand 0']
    #allocation3 [shape = 's32[2]{0}', space=sflag, size = 0x8, scoped, tag = 'scoped memory for tpu_custom_call.1']
    #allocation4 [shape = 's32[2]{0}', space=sflag, size = 0x8, scoped, tag = 'scoped memory for tpu_custom_call.1']
    #allocation5 [shape = 'u8[16384]{0}', space=vmem, size = 0x4000, scoped, tag = 'input window, operand 1, single buffered']
    #allocation6 [shape = 's32[1]{0}', space=sflag, size = 0x4, scoped, tag = 'scoped memory for tpu_custom_call.1']
    #allocation7 [shape = 'u8[8192]{0}', space=vmem, size = 0x2000, scoped, tag = 'output window, operand 0']
    %11 = vsyncpa [#allocation3], 0
    %s12 = scalar_lea.sflag [#allocation3], 1
    %13 = vsyncpa %s12, 0
    %14 = vsyncpa [#allocation6], 0
    %15 = vsyncpa [#allocation4], 0
    %s16 = scalar_lea.sflag [#allocation4], 1
    %17 = vsyncpa %s16, 0
    loop: start=0, step=1, limit=4
    $region2: #{tpu_custom_call.1} parent=1 // loop_pre_header
      _
    $region3: #{tpu_custom_call.1} parent=1 // loop_header
      %s19 = sphi 0, %s23
      %p20 = scmp.ge.s32.totalorder %s19, 4
      %s29 = sphi 0, %s31
      %s32 = sphi 0, %s29
      %s33 = sphi 0, %s32
      %s49 = sphi 0, %s33
      %s53 = sphi 0, %s53
      %s55 = sphi 0, %s53
      %s56 = sphi 0, %s55
      %s70 = sphi 0, %s56
      %s74 = sphi 0, %s74
      %s76 = sphi 0, %s74
      %s77 = sphi 0, %s76
      %s91 = sphi 0, %s77
      %s95 = sphi 0, %s95
      %s97 = sphi 0, %s95
      %s98 = sphi 0, %s97
      %s112 = sphi 0, %s98
      %s116 = sphi 0, %s116
      %s118 = sphi 0, %s116
      %s119 = sphi 0, %s118
      %s133 = sphi 0, %s119
      %s137 = sphi 0, %s137
      %s139 = sphi 0, %s137
      %s140 = sphi 0, %s139
      %s154 = sphi 0, %s140
      %s160 = sphi 0, %s162
      %s163 = sphi 0, %s160
      %s164 = sphi 0, %s163
      %s180 = sphi 0, %s164
    $region4: #{tpu_custom_call.1} parent=1 // loop_header_branch
      %22 = sbr.rel (%p20) target = $region8
    $region5: #{tpu_custom_call.1} parent=1 // loop_body
      %s24 = ssub.s32 %s19, 1
      %s25 = ssub.s32 %s19, 2
      %s26 = sadd.s32 %s19, 1
      %s27 = ssub.s32 %s19, %s26
      %p28 = scmp.eq.s32.totalorder %s27, 0
      %s30 = sadd.s32 %s29, 1
      %s31 = scalar_select %p28, %s29, %s30
      %p34 = pneg %p28
      %p35 = scmp.eq.s32.totalorder %s19, 1
      %p36 = por %p34, %p35
      %p37 = scmp.ne.s32.totalorder %s29, %s32
      %p38 = scmp.eq.s32.totalorder %s19, 0
      %p39 = por %p37, %p38
      %p40 = scmp.ne.s32.totalorder %s29, %s32
      %p41 = scmp.eq.s32.totalorder %s24, 1
      %p42 = por %p40, %p41
      %p43 = scmp.ne.s32.totalorder %s32, %s33
      %p44 = scmp.eq.s32.totalorder %s24, 0
      %p45 = por %p43, %p44
      %p46 = scmp.ne.s32.totalorder %s32, %s33
      %p47 = scmp.eq.s32.totalorder %s25, 1
      %p48 = por %p46, %p47
      %p50 = scmp.ne.s32.totalorder %s33, %s49
      %p51 = scmp.eq.s32.totalorder %s25, 0
      %p52 = por %p50, %p51
      %s54 = sadd.s32 %s53, 1
      %p57 = scmp.eq.s32.totalorder %s19, 1
      %p58 = scmp.ne.s32.totalorder %s53, %s55
      %p59 = scmp.eq.s32.totalorder %s19, 0
      %p60 = por %p58, %p59
      %p61 = scmp.ne.s32.totalorder %s53, %s55
      %p62 = scmp.eq.s32.totalorder %s24, 1
      %p63 = por %p61, %p62
      %p64 = scmp.ne.s32.totalorder %s55, %s56
      %p65 = scmp.eq.s32.totalorder %s24, 0
      %p66 = por %p64, %p65
      %p67 = scmp.ne.s32.totalorder %s55, %s56
      %p68 = scmp.eq.s32.totalorder %s25, 1
      %p69 = por %p67, %p68
      %p71 = scmp.ne.s32.totalorder %s56, %s70
      %p72 = scmp.eq.s32.totalorder %s25, 0
      %p73 = por %p71, %p72
      %s75 = sadd.s32 %s74, 1
      %p78 = scmp.eq.s32.totalorder %s19, 1
      %p79 = scmp.ne.s32.totalorder %s74, %s76
      %p80 = scmp.eq.s32.totalorder %s19, 0
      %p81 = por %p79, %p80
      %p82 = scmp.ne.s32.totalorder %s74, %s76
      %p83 = scmp.eq.s32.totalorder %s24, 1
      %p84 = por %p82, %p83
      %p85 = scmp.ne.s32.totalorder %s76, %s77
      %p86 = scmp.eq.s32.totalorder %s24, 0
      %p87 = por %p85, %p86
      %p88 = scmp.ne.s32.totalorder %s76, %s77
      %p89 = scmp.eq.s32.totalorder %s25, 1
      %p90 = por %p88, %p89
      %p92 = scmp.ne.s32.totalorder %s77, %s91
      %p93 = scmp.eq.s32.totalorder %s25, 0
      %p94 = por %p92, %p93
      %s96 = sadd.s32 %s95, 1
      %p99 = scmp.eq.s32.totalorder %s19, 1
      %p100 = scmp.ne.s32.totalorder %s95, %s97
      %p101 = scmp.eq.s32.totalorder %s19, 0
      %p102 = por %p100, %p101
      %p103 = scmp.ne.s32.totalorder %s95, %s97
      %p104 = scmp.eq.s32.totalorder %s24, 1
      %p105 = por %p103, %p104
      %p106 = scmp.ne.s32.totalorder %s97, %s98
      %p107 = scmp.eq.s32.totalorder %s24, 0
      %p108 = por %p106, %p107
      %p109 = scmp.ne.s32.totalorder %s97, %s98
      %p110 = scmp.eq.s32.totalorder %s25, 1
      %p111 = por %p109, %p110
      %p113 = scmp.ne.s32.totalorder %s98, %s112
      %p114 = scmp.eq.s32.totalorder %s25, 0
      %p115 = por %p113, %p114
      %s117 = sadd.s32 %s116, 1
      %p120 = scmp.eq.s32.totalorder %s19, 1
      %p121 = scmp.ne.s32.totalorder %s116, %s118
      %p122 = scmp.eq.s32.totalorder %s19, 0
      %p123 = por %p121, %p122
      %p124 = scmp.ne.s32.totalorder %s116, %s118
      %p125 = scmp.eq.s32.totalorder %s24, 1
      %p126 = por %p124, %p125
      %p127 = scmp.ne.s32.totalorder %s118, %s119
      %p128 = scmp.eq.s32.totalorder %s24, 0
      %p129 = por %p127, %p128
      %p130 = scmp.ne.s32.totalorder %s118, %s119
      %p131 = scmp.eq.s32.totalorder %s25, 1
      %p132 = por %p130, %p131
      %p134 = scmp.ne.s32.totalorder %s119, %s133
      %p135 = scmp.eq.s32.totalorder %s25, 0
      %p136 = por %p134, %p135
      %s138 = sadd.s32 %s137, 1
      %p141 = scmp.eq.s32.totalorder %s19, 1
      %p142 = scmp.ne.s32.totalorder %s137, %s139
      %p143 = scmp.eq.s32.totalorder %s19, 0
      %p144 = por %p142, %p143
      %p145 = scmp.ne.s32.totalorder %s137, %s139
      %p146 = scmp.eq.s32.totalorder %s24, 1
      %p147 = por %p145, %p146
      %p148 = scmp.ne.s32.totalorder %s139, %s140
      %p149 = scmp.eq.s32.totalorder %s24, 0
      %p150 = por %p148, %p149
      %p151 = scmp.ne.s32.totalorder %s139, %s140
      %p152 = scmp.eq.s32.totalorder %s25, 1
      %p153 = por %p151, %p152
      %p155 = scmp.ne.s32.totalorder %s140, %s154
      %p156 = scmp.eq.s32.totalorder %s25, 0
      %p157 = por %p155, %p156
      %s158 = ssub.s32 %s19, %s26
      %p159 = scmp.eq.s32.totalorder %s158, 0
      %s161 = sadd.s32 %s160, 1
      %s162 = scalar_select %p159, %s160, %s161
      %p165 = pneg %p159
      %p166 = scmp.eq.s32.totalorder %s19, 1
      %p167 = por %p165, %p166
      %p168 = scmp.ne.s32.totalorder %s160, %s163
      %p169 = scmp.eq.s32.totalorder %s19, 0
      %p170 = por %p168, %p169
      %p171 = scmp.ne.s32.totalorder %s160, %s163
      %p172 = scmp.eq.s32.totalorder %s24, 1
      %p173 = por %p171, %p172
      %p174 = scmp.ne.s32.totalorder %s163, %s164
      %p175 = scmp.eq.s32.totalorder %s24, 0
      %p176 = por %p174, %p175
      %p177 = scmp.ne.s32.totalorder %s163, %s164
      %p178 = scmp.eq.s32.totalorder %s25, 1
      %p179 = por %p177, %p178
      %p181 = scmp.ne.s32.totalorder %s164, %s180
      %p182 = scmp.eq.s32.totalorder %s25, 0
      %p183 = por %p181, %p182
      %p184 = scmp.le.s32.totalorder 1, %s19
      %p185 = scmp.lt.s32.totalorder %s19, 3
      %p186 = pnand %p184, %p185
      %p187 = pneg %p186
      // Predicated region
      $region9: #{tpu_custom_call.1} parent=5 // pred_check
        _
      $region10: #{tpu_custom_call.1} parent=5 // pred_check_branch
        %189 = sbr.rel (%p186) target = $region12
      $region11: #{tpu_custom_call.1} parent=5 // pred_region
        %s190 = ssub.s32 %s19, 1
        // Predicated region
        $region13: #{tpu_custom_call.1} parent=11 // pred_check
          %p191 = pneg %p66
        $region14: #{tpu_custom_call.1} parent=11 // pred_check_branch
          %193 = sbr.rel (%p191) target = $region16
        $region15: #{tpu_custom_call.1} parent=11 // pred_region
          %s195 = ssub.s32 512, 512
          %196 = vsyncadd [#allocation6], %s195
          %s197 = sshll.u32 [#allocation5], 4
          %s198 = int_to_ptr.vmem [resolvable:$true] %s197
          %203 = dma.hbm_to_vmem [thread:$0]  %s1, 512, %s198, [#allocation6], 128, 128, 8
        $region16: #{tpu_custom_call.1} parent=11 // pred_fallthru
          _
        // Predicated region
        $region17: #{tpu_custom_call.1} parent=11 // pred_check
          %p204 = pneg %p87
        $region18: #{tpu_custom_call.1} parent=11 // pred_check_branch
          %206 = sbr.rel (%p204) target = $region20
        $region19: #{tpu_custom_call.1} parent=11 // pred_region
          _
        $region20: #{tpu_custom_call.1} parent=11 // pred_fallthru
          _
        // Predicated region
        $region21: #{tpu_custom_call.1} parent=11 // pred_check
          %p207 = pneg %p108
        $region22: #{tpu_custom_call.1} parent=11 // pred_check_branch
          %209 = sbr.rel (%p207) target = $region24
        $region23: #{tpu_custom_call.1} parent=11 // pred_region
          _
        $region24: #{tpu_custom_call.1} parent=11 // pred_fallthru
          _
        // Predicated region
        $region25: #{tpu_custom_call.1} parent=11 // pred_check
          %p210 = pneg %p129
        $region26: #{tpu_custom_call.1} parent=11 // pred_check_branch
          %212 = sbr.rel (%p210) target = $region28
        $region27: #{tpu_custom_call.1} parent=11 // pred_region
          _
        $region28: #{tpu_custom_call.1} parent=11 // pred_fallthru
          _
        // Predicated region
        $region29: #{tpu_custom_call.1} parent=11 // pred_check
          %p213 = pneg %p150
        $region30: #{tpu_custom_call.1} parent=11 // pred_check_branch
          %215 = sbr.rel (%p213) target = $region32
        $region31: #{tpu_custom_call.1} parent=11 // pred_region
          _
        $region32: #{tpu_custom_call.1} parent=11 // pred_fallthru
          _
      $region12: #{tpu_custom_call.1} parent=5 // pred_fallthru
        _
      %p216 = scmp.lt.s32.totalorder %s19, 2
      // Predicated region
      $region33: #{tpu_custom_call.1} parent=5 // pred_check
        %p217 = pneg %p216
      $region34: #{tpu_custom_call.1} parent=5 // pred_check_branch
        %219 = sbr.rel (%p217) target = $region36
      $region35: #{tpu_custom_call.1} parent=5 // pred_region
        // Predicated region
        $region37: #{tpu_custom_call.1} parent=35 // pred_check
          %p220 = pneg %p39
        $region38: #{tpu_custom_call.1} parent=35 // pred_check_branch
          %222 = sbr.rel (%p220) target = $region40
        $region39: #{tpu_custom_call.1} parent=35 // pred_region
          %s223 = sand.u32 %s29, 1
          %s224 = scalar_lea.sflag [#allocation3], %s223
          %s225 = sand.u32 %s29, 1
          %s226 = smul.addr %s225, 8
          %s227 = scalar_lea.vmem [#allocation2], %s226
          %s229 = ssub.s32 128, 128
          %230 = vsyncadd %s224, %s229
          %s231 = smul.addr %s19, 128
          %s232 = scalar_lea.hbm %s0, %s231
          %s234 = sshll.u32 %s227, 4
          %s235 = int_to_ptr.vmem [resolvable:$true] %s234
          %237 = dma.hbm_to_vmem [thread:$0]  %s232, 128, %s235, %s224
        $region40: #{tpu_custom_call.1} parent=35 // pred_fallthru
          _
      $region36: #{tpu_custom_call.1} parent=5 // pred_fallthru
        _
      %p238 = scmp.le.s32.totalorder 1, %s19
      %p239 = scmp.lt.s32.totalorder %s19, 3
      %p240 = pnand %p238, %p239
      %p241 = pneg %p240
      // Predicated region
      $region41: #{tpu_custom_call.1} parent=5 // pred_check
        _
      $region42: #{tpu_custom_call.1} parent=5 // pred_check_branch
        %243 = sbr.rel (%p240) target = $region44
      $region43: #{tpu_custom_call.1} parent=5 // pred_region
        %s244 = ssub.s32 %s19, 1
        %s245 = sand.u32 %s32, 1
        %s246 = scalar_lea.sflag [#allocation3], %s245
        %s247 = sand.u32 %s32, 1
        %s248 = smul.addr %s247, 8
        %s249 = scalar_lea.vmem [#allocation2], %s248
        // Predicated region
        $region45: #{tpu_custom_call.1} parent=43 // pred_check
          %p250 = pneg %p45
        $region46: #{tpu_custom_call.1} parent=43 // pred_check_branch
          %252 = sbr.rel (%p250) target = $region48
        $region47: #{tpu_custom_call.1} parent=43 // pred_region
          %253 = dma.done %s246, 128
        $region48: #{tpu_custom_call.1} parent=43 // pred_fallthru
          _
        // Predicated region
        $region49: #{tpu_custom_call.1} parent=43 // pred_check
          %p254 = pneg %p66
        $region50: #{tpu_custom_call.1} parent=43 // pred_check_branch
          %256 = sbr.rel (%p254) target = $region52
        $region51: #{tpu_custom_call.1} parent=43 // pred_region
          %257 = dma.done [#allocation6], 512
        $region52: #{tpu_custom_call.1} parent=43 // pred_fallthru
          _
        %s258 = sand.u32 %s32, 1
        %s259 = scalar_lea.sflag [#allocation3], %s258
        %s260 = sand.u32 %s32, 1
        %s261 = smul.addr %s260, 8
        %s262 = scalar_lea.vmem [#allocation2], %s261
        %p263 = pneg %p45
        %p264 = pneg %p42
        %p265 = pneg %p66
        %p266 = pneg %p63
        %p267 = pneg %p87
        %p268 = pneg %p84
        %p269 = pneg %p108
        %p270 = pneg %p105
        %p271 = pneg %p129
        %p272 = pneg %p126
        %p273 = pneg %p150
        %p274 = pneg %p147
        %p275 = pneg %p176
        %p276 = pneg %p173
        %s277 = sand.u32 %s163, 1
        %s278 = scalar_lea.sflag [#allocation4], %s277
        %s279 = sand.u32 %s163, 1
        %s280 = smul.addr %s279, 8
        %s281 = scalar_lea.vmem [#allocation7], %s280
        %v282 = vld [vmem:[%s249] sm:$0xff]
        %v283 = vld [vmem:[#allocation5] sm:$0xff]
        %v284 = vld [vmem:[#allocation5 + $0x8] sm:$0xff]
        %v285 = vld [vmem:[#allocation5 + $0x10] sm:$0xff]
        %v286 = vld [vmem:[#allocation5 + $0x18] sm:$0xff]
        %v287 = vld [vmem:[%s2] sm:$0x1]
        %v289 = vlaneseq
        %v290 = vshrl.u32 %v289, 7
        %v291 = vsub.s32 0, %v290
        %v292 = vrot.slane %v287, %v291
        %vm294 = vcmask 261120
        %v296 = vsel %vm294, %v282, 0
        %298 = vmatprep.subr.mxu0 0.0
        %299 = vmatpush1.msra.mxu0 %v283
        %300 = vmatprep.subr.mxu0 0.0
        %301 = vmatpush1.msra.mxu0 %v284
        %302 = vmatprep.subr.mxu0 0.0
        %303 = vmatpush1.msra.mxu0 %v285
        %304 = vmatprep.subr.mxu0 0.0
        %305 = vmatpush1.msra.mxu0 %v286
        %306 = vmatprep.subr.mxu0 0.0
        %307 = vmatpush1.msra.mxu0 0.0
        %308 = vmatprep.subr.mxu0 0.0
        %309 = vmatpush1.msra.mxu0 0.0
        %310 = vmatprep.subr.mxu0 0.0
        %311 = vmatpush1.msra.mxu0 0.0
        %312 = vmatprep.subr.mxu0 0.0
        %313 = vmatpush1.msra.mxu0 0.0
        %314 = vmatprep.subr.mxu0 0.0
        %315 = vmatpush1.msra.mxu0 0.0
        %316 = vmatprep.subr.mxu0 0.0
        %317 = vmatpush1.msra.mxu0 0.0
        %318 = vmatprep.subr.mxu0 0.0
        %319 = vmatpush1.msra.mxu0 0.0
        %320 = vmatprep.subr.mxu0 0.0
        %321 = vmatpush1.msra.mxu0 0.0
        %322 = vmatprep.subr.mxu0 0.0
        %323 = vmatpush1.msra.mxu0 0.0
        %324 = vmatprep.subr.mxu0 0.0
        %325 = vmatpush1.msra.mxu0 0.0
        %326 = vmatprep.subr.mxu0 0.0
        %327 = vmatpush1.msra.mxu0 0.0
        %328 = vmatprep.subr.mxu0 0.0
        %329 = vmatpush1.msra.mxu0 0.0
        %330 = vmatprep.subr.mxu0 0.0
        %331 = vmatpush1.msra.mxu0 0.0
        %332 = vmatprep.subr.mxu0 0.0
        %333 = vmatpush1.msra.mxu0 0.0
        %334 = vmatprep.subr.mxu0 0.0
        %335 = vmatpush1.msra.mxu0 0.0
        %336 = vmatprep.subr.mxu0 0.0
        %337 = vmatpush1.msra.mxu0 0.0
        %338 = vmatprep.subr.mxu0 0.0
        %339 = vmatpush1.msra.mxu0 0.0
        %340 = vmatprep.subr.mxu0 0.0
        %341 = vmatpush1.msra.mxu0 0.0
        %342 = vmatprep.subr.mxu0 0.0
        %343 = vmatpush1.msra.mxu0 0.0
        %344 = vmatprep.subr.mxu0 0.0
        %345 = vmatpush1.msra.mxu0 0.0
        %346 = vmatprep.subr.mxu0 0.0
        %347 = vmatpush1.msra.mxu0 0.0
        %348 = vmatprep.subr.mxu0 0.0
        %349 = vmatpush1.msra.mxu0 0.0
        %350 = vmatprep.subr.mxu0 0.0
        %351 = vmatpush1.msra.mxu0 0.0
        %352 = vmatprep.subr.mxu0 0.0
        %353 = vmatpush1.msra.mxu0 0.0
        %354 = vmatprep.subr.mxu0 0.0
        %355 = vmatpush1.msra.mxu0 0.0
        %356 = vmatprep.subr.mxu0 0.0
        %357 = vmatpush1.msra.mxu0 0.0
        %358 = vmatprep.subr.mxu0 0.0
        %359 = vmatpush1.msra.mxu0 0.0
        %360 = vmatprep.subr.mxu0 0.0
        %361 = vmatpush1.msra.mxu0 0.0
        %362 = vmatprep.mubr.f32.mxu0 0.0
        %363 = vmatmul.mubr.f32.gmra.mrb[0].mxu0 %v296
        %v364 = vpop.f32.mrb[0].mxu0
        %v365 = vadd.f32 %v292, %v364
        %v366 = vpop.f32.mrb[0].mxu0
        %367 = vdwg.mxu0
        %v368 = vld [vmem:[%s4] sm:$0x1]
        %v369 = vld [vmem:[%s5] sm:$0x1]
        %370 = vadd.xlane.f32.xlu0 %v365
        %v371 = vpop.xlane.xlu0 %370
        %v372 = vrcp.pop 128.0
        %v373 = vmul.f32 %v371, %v372
        %v374 = vsub.f32 %v365, %v373
        %v375 = vmul.f32 %v374, %v374
        %376 = vadd.xlane.f32.xlu0 %v375
        %v377 = vpop.xlane.xlu0 %376
        %v378 = vmul.f32 %v377, %v372
        %v379 = vadd.f32 %v378, 1e-12
        %v380 = vrsqrt.pop %v379
        %v381 = vmul.f32 %v374, %v380
        %v383 = vlaneseq
        %v384 = vshrl.u32 %v383, 7
        %v385 = vsub.s32 0, %v384
        %v386 = vrot.slane %v368, %v385
        %v388 = vmul.f32 %v386, %v381
        %v390 = vlaneseq
        %v391 = vshrl.u32 %v390, 7
        %v392 = vsub.s32 0, %v391
        %v393 = vrot.slane %v369, %v392
        %v395 = vadd.f32 %v388, %v393
        %v396 = vld [vmem:[%s3] sm:$0xff]
        %v397 = vadd.f32 %v395, %v396
        %398 = vadd.xlane.f32.xlu0 %v397
        %v399 = vpop.xlane.xlu0 %398
        %v400 = vmul.f32 %v399, %v372
        %v401 = vsub.f32 %v397, %v400
        %v402 = vmul.f32 %v401, %v401
        %403 = vadd.xlane.f32.xlu0 %v402
        %v404 = vpop.xlane.xlu0 %403
        %v405 = vmul.f32 %v404, %v372
        %v406 = vadd.f32 %v405, 1e-12
        %v407 = vrsqrt.pop %v406
        %v408 = vmul.f32 %v401, %v407
        %v409 = vmul.f32 %v386, %v408
        %v410 = vadd.f32 %v409, %v393
        %411 = vst [vmem:[%s281] sm:$0xff] %v410
        %s412 = sand.u32 %s163, 1
        %s413 = scalar_lea.sflag [#allocation4], %s412
        %s414 = sand.u32 %s163, 1
        %s415 = smul.addr %s414, 8
        %s416 = scalar_lea.vmem [#allocation7], %s415
        // Predicated region
        $region53: #{tpu_custom_call.1} parent=43 // pred_check
          %p417 = pneg %p173
        $region54: #{tpu_custom_call.1} parent=43 // pred_check_branch
          %419 = sbr.rel (%p417) target = $region56
        $region55: #{tpu_custom_call.1} parent=43 // pred_region
          %s421 = ssub.s32 128, 128
          %422 = vsyncadd %s413, %s421
          %s423 = smul.addr %s24, 128
          %s424 = scalar_lea.hbm %s6, %s423
          %s426 = sshll.u32 %s416, 4
          %s427 = int_to_ptr.vmem [resolvable:$true] %s426
          %429 = dma.vmem_to_hbm [thread:$0]  %s427, 128, %s424, %s413
        $region56: #{tpu_custom_call.1} parent=43 // pred_fallthru
          _
      $region44: #{tpu_custom_call.1} parent=5 // pred_fallthru
        _
      %p430 = scmp.le.s32.totalorder 2, %s19
      // Predicated region
      $region57: #{tpu_custom_call.1} parent=5 // pred_check
        %p431 = pneg %p430
      $region58: #{tpu_custom_call.1} parent=5 // pred_check_branch
        %433 = sbr.rel (%p431) target = $region60
      $region59: #{tpu_custom_call.1} parent=5 // pred_region
        %s434 = ssub.s32 %s19, 2
        // Predicated region
        $region61: #{tpu_custom_call.1} parent=59 // pred_check
          %p435 = pneg %p179
        $region62: #{tpu_custom_call.1} parent=59 // pred_check_branch
          %437 = sbr.rel (%p435) target = $region64
        $region63: #{tpu_custom_call.1} parent=59 // pred_region
          %s438 = sand.u32 %s164, 1
          %s439 = scalar_lea.sflag [#allocation4], %s438
          %s440 = sand.u32 %s164, 1
          %s441 = smul.addr %s440, 8
          %s442 = scalar_lea.vmem [#allocation7], %s441
          %443 = dma.done %s439, 128
        $region64: #{tpu_custom_call.1} parent=59 // pred_fallthru
          _
      $region60: #{tpu_custom_call.1} parent=5 // pred_fallthru
        _
    $region6: #{tpu_custom_call.1} parent=1 // loop_footer
      %s23 = sadd.s32 1, %s19
    $region7: #{tpu_custom_call.1} parent=1 // loop_footer_branch
      %18 = sbr.rel target = $region3
    $region8: #{tpu_custom_call.1} parent=1 // loop_exit
      _
    %444 = vsyncpa [#allocation3], 1
    %s445 = scalar_lea.sflag [#allocation3], 1
    %446 = vsyncpa %s445, 1
    %447 = vsyncpa [#allocation6], 1
    %448 = vsyncpa [#allocation4], 1
    %s449 = scalar_lea.sflag [#allocation4], 1
    %450 = vsyncpa %s449, 1

</llo_original>
